<compile_context>
chip_gen: v5e
topology: v5e:2x2
jax: 0.10.0
libtpu: 0.0.40
codegen_flags: <defaults>
</compile_context>

<pallas_src>
import functools

import jax
import jax.numpy as jnp
from jax.experimental import pallas as pl
from jax.experimental.pallas import tpu as pltpu


def _round_up(n: int, m: int) -> int:
    return ((n + m - 1) // m) * m


def _mlp_kernel(x_ref, w1_ref, b1_ref, w2_ref, b2_ref, w3_ref, b3_ref, o_ref):
    # Stage 1: Linear + ReLU.  bf16 MXU inputs, f32 accumulation, f32 epilogue.
    h1 = b1_ref[...] + jnp.dot(x_ref[...], w1_ref[...],
                               preferred_element_type=jnp.float32)
    h1 = jnp.maximum(h1, 0.0)

    # Stage 2: Linear + ReLU.  Downcast only the matmul operand to bf16.
    h2 = b2_ref[...] + jnp.dot(h1.astype(w2_ref.dtype), w2_ref[...],
                               preferred_element_type=jnp.float32)
    h2 = jnp.maximum(h2, 0.0)

    # Stage 3: Linear (output columns padded to a lane-dense multiple of 128).
    y = b3_ref[...] + jnp.dot(h2.astype(w3_ref.dtype), w3_ref[...],
                              preferred_element_type=jnp.float32)
    o_ref[...] = y.astype(o_ref.dtype)


@functools.partial(jax.jit, static_argnames=("block_b",))
def model_forward(x, w1, b1, w2, b2, w3, b3, *, block_b: int = 512):
    """y = relu(x@w1+b1) @ w2 + b2 -> relu -> @ w3 + b3  (all f32 semantics,
    bf16 matmul operands, f32 accumulation)."""
    B, in_features = x.shape
    out_features = w3.shape[1]
    out_dtype = jnp.float32

    # ---- batch tiling: block is a multiple of 8 (sublanes), pad batch up ----
    block_b = min(block_b, _round_up(B, 8))
    b_pad = _round_up(B, block_b)
    if b_pad != B:
        x = jnp.pad(x, ((0, b_pad - B), (0, 0)))

    # ---- lane-dense output: pad out_features to a multiple of 128 ----------
    n_pad = _round_up(out_features, 128)
    w3p = jnp.pad(w3, ((0, 0), (0, n_pad - out_features)))
    b3p = jnp.pad(b3, ((0, 0), (0, n_pad - out_features)))

    # ---- dtypes: bf16 matmul operands, f32 biases / epilogue ---------------
    mm_dtype = jnp.bfloat16
    xq = x.astype(mm_dtype)
    w1q, w2q, w3q = (w.astype(mm_dtype) for w in (w1, w2, w3p))
    b1f, b2f, b3f = (b.astype(jnp.float32) for b in (b1, b2, b3p))

    grid = (b_pad // block_b,)

    def resident(shape):
        # Constant index_map -> the block is fetched once and stays in VMEM
        # for every grid step (weights / biases).
        return pl.BlockSpec(shape, lambda i: (0, 0))

    out = pl.pallas_call(
        _mlp_kernel,
        out_shape=jax.ShapeDtypeStruct((b_pad, n_pad), out_dtype),
        grid=grid,
        in_specs=[
            pl.BlockSpec((block_b, in_features), lambda i: (i, 0)),  # x tile
            resident(w1q.shape), resident(b1f.shape),
            resident(w2q.shape), resident(b2f.shape),
            resident(w3q.shape), resident(b3f.shape),
        ],
        out_specs=pl.BlockSpec((block_b, n_pad), lambda i: (i, 0)),
        compiler_params=pltpu.CompilerParams(
            # Batch tiles are independent -> shard across TCs on v7x.
            dimension_semantics=("parallel",),
            # Tiny footprint here (< 2 MiB); 32 MiB is safe on v5e/v6e/v7x and
            # leaves room to push block_b up.
            vmem_limit_bytes=32 * 1024 * 1024,
        ),
    )(xq, w1q, b1f, w2q, b2f, w3q, b3f)

    # Strip batch / lane padding.
    return out[:B, :out_features]


def _reference_bf16(x, w1, b1, w2, b2, w3, b3):
    """Reference with the same bf16-operand / f32-accumulate casting as the kernel."""
    bf = jnp.bfloat16
    h1 = jnp.maximum(
        jnp.dot(x.astype(bf), w1.astype(bf), preferred_element_type=jnp.float32) + b1, 0.0)
    h2 = jnp.maximum(
        jnp.dot(h1.astype(bf), w2.astype(bf), preferred_element_type=jnp.float32) + b2, 0.0)
    return jnp.dot(h2.astype(bf), w3.astype(bf), preferred_element_type=jnp.float32) + b3


def _reference_f32(x, w1, b1, w2, b2, w3, b3):
    h1 = jnp.maximum(x @ w1 + b1, 0.0)
    h2 = jnp.maximum(h1 @ w2 + b2, 0.0)
    return h2 @ w3 + b3


if __name__ == "__main__":
    # Small shapes consistent with the module's composition.
    batch = 8
    in_features = 32
    inner_model_input_size = 64    # H1
    inner_model_output_size = 64   # H2
    out_features = 16

    key = jax.random.PRNGKey(0)
    kx, k1, k2, k3, kb1, kb2, kb3, kx2 = jax.random.split(key, 8)

    x = jax.random.normal(kx, (batch, in_features), dtype=jnp.float32)

    w1 = jax.random.normal(k1, (in_features, inner_model_input_size),
                           dtype=jnp.float32) * (1.0 / jnp.sqrt(in_features))
    b1 = jax.random.normal(kb1, (1, inner_model_input_size), dtype=jnp.float32) * 0.01
    w2 = jax.random.normal(k2, (inner_model_input_size, inner_model_output_size),
                           dtype=jnp.float32) * (1.0 / jnp.sqrt(inner_model_input_size))
    b2 = jax.random.normal(kb2, (1, inner_model_output_size), dtype=jnp.float32) * 0.01
    w3 = jax.random.normal(k3, (inner_model_output_size, out_features),
                           dtype=jnp.float32) * (1.0 / jnp.sqrt(inner_model_output_size))
    b3 = jax.random.normal(kb3, (1, out_features), dtype=jnp.float32) * 0.01

    # ---- small-batch run (grid of 1) ---------------------------------------
    out = jax.block_until_ready(model_forward(x, w1, b1, w2, b2, w3, b3))
    assert out.shape == (batch, out_features)
    ref_bf16 = _reference_bf16(x, w1, b1, w2, b2, w3, b3)
    ref_f32 = _reference_f32(x, w1, b1, w2, b2, w3, b3)
    assert jnp.allclose(out, ref_bf16, atol=2e-3, rtol=2e-3)      # exact-path check
    assert jnp.allclose(out, ref_f32, atol=5e-2, rtol=5e-2)       # semantics sanity check

    # ---- larger batch: exercises multi-step grid + batch padding -----------
    big_batch = 1000  # not a multiple of the 512-row block -> tests padding path
    xb = jax.random.normal(kx2, (big_batch, in_features), dtype=jnp.float32)
    out_b = jax.block_until_ready(model_forward(xb, w1, b1, w2, b2, w3, b3))
    assert out_b.shape == (big_batch, out_features)
    ref_b = _reference_bf16(xb, w1, b1, w2, b2, w3, b3)
    assert jnp.allclose(out_b, ref_b, atol=2e-3, rtol=2e-3)

    print("KERNEL_OK")
</pallas_src>

<mosaic_0001>
module attributes {stable_mosaic.version = 11 : i64} {
  func.func @_mlp_kernel(%arg0: i32, %arg1: memref<8x32xbf16, #tpu.memory_space<vmem>>, %arg2: memref<32x64xbf16, #tpu.memory_space<vmem>>, %arg3: memref<1x64xf32, #tpu.memory_space<vmem>>, %arg4: memref<64x64xbf16, #tpu.memory_space<vmem>>, %arg5: memref<1x64xf32, #tpu.memory_space<vmem>>, %arg6: memref<64x128xbf16, #tpu.memory_space<vmem>>, %arg7: memref<1x128xf32, #tpu.memory_space<vmem>>, %arg8: memref<8x128xf32, #tpu.memory_space<vmem>>) attributes {dimension_semantics = [#tpu.dimension_semantics<parallel>], iteration_bounds = array<i64: 1>, scalar_prefetch = 0 : i64, scratch_operands = 0 : i64, tpu.core_type = #tpu.core_type<tc>, window_params = [{transform_indices = @transform_0, window_bounds = array<i64: 8, 32>}, {pipeline_mode = #tpu.pipeline_mode<synchronous>, transform_indices = @transform_1, window_bounds = array<i64: 32, 64>}, {pipeline_mode = #tpu.pipeline_mode<synchronous>, transform_indices = @transform_2, window_bounds = array<i64: 1, 64>}, {pipeline_mode = #tpu.pipeline_mode<synchronous>, transform_indices = @transform_3, window_bounds = array<i64: 64, 64>}, {pipeline_mode = #tpu.pipeline_mode<synchronous>, transform_indices = @transform_4, window_bounds = array<i64: 1, 64>}, {pipeline_mode = #tpu.pipeline_mode<synchronous>, transform_indices = @transform_5, window_bounds = array<i64: 64, 128>}, {pipeline_mode = #tpu.pipeline_mode<synchronous>, transform_indices = @transform_6, window_bounds = array<i64: 1, 128>}, {transform_indices = @transform_7, window_bounds = array<i64: 8, 128>}]} {
    %c0 = arith.constant 0 : index
    %c0_0 = arith.constant 0 : index
    %0 = vector.load %arg3[%c0, %c0_0] : memref<1x64xf32, #tpu.memory_space<vmem>>, vector<1x64xf32>
    %c0_1 = arith.constant 0 : index
    %c0_2 = arith.constant 0 : index
    %1 = vector.load %arg1[%c0_1, %c0_2] : memref<8x32xbf16, #tpu.memory_space<vmem>>, vector<8x32xbf16>
    %c0_3 = arith.constant 0 : index
    %c0_4 = arith.constant 0 : index
    %2 = vector.load %arg2[%c0_3, %c0_4] : memref<32x64xbf16, #tpu.memory_space<vmem>>, vector<32x64xbf16>
    %cst = arith.constant dense<0.000000e+00> : vector<8x64xf32>
    %3 = tpu.matmul %1, %2, %cst {dimension_numbers = #tpu.dot_dimension_numbers<[1], [0], [0], [1], [0, 0, 1, 1], [], []>} : vector<8x32xbf16>, vector<32x64xbf16>, vector<8x64xf32> -> vector<8x64xf32>
    %4 = vector.broadcast %0 : vector<1x64xf32> to vector<8x64xf32>
    %5 = arith.addf %4, %3 : vector<8x64xf32>
    %cst_5 = arith.constant 0.000000e+00 : f32
    %6 = vector.broadcast %cst_5 : f32 to vector<8x64xf32>
    %7 = arith.maximumf %5, %6 : vector<8x64xf32>
    %c0_6 = arith.constant 0 : index
    %c0_7 = arith.constant 0 : index
    %8 = vector.load %arg5[%c0_6, %c0_7] : memref<1x64xf32, #tpu.memory_space<vmem>>, vector<1x64xf32>
    %9 = arith.truncf %7 : vector<8x64xf32> to vector<8x64xbf16>
    %c0_8 = arith.constant 0 : index
    %c0_9 = arith.constant 0 : index
    %10 = vector.load %arg4[%c0_8, %c0_9] : memref<64x64xbf16, #tpu.memory_space<vmem>>, vector<64x64xbf16>
    %cst_10 = arith.constant dense<0.000000e+00> : vector<8x64xf32>
    %11 = tpu.matmul %9, %10, %cst_10 {dimension_numbers = #tpu.dot_dimension_numbers<[1], [0], [0], [1], [0, 0, 1, 1], [], []>} : vector<8x64xbf16>, vector<64x64xbf16>, vector<8x64xf32> -> vector<8x64xf32>
    %12 = vector.broadcast %8 : vector<1x64xf32> to vector<8x64xf32>
    %13 = arith.addf %12, %11 : vector<8x64xf32>
    %cst_11 = arith.constant 0.000000e+00 : f32
    %14 = vector.broadcast %cst_11 : f32 to vector<8x64xf32>
    %15 = arith.maximumf %13, %14 : vector<8x64xf32>
    %c0_12 = arith.constant 0 : index
    %c0_13 = arith.constant 0 : index
    %16 = vector.load %arg7[%c0_12, %c0_13] : memref<1x128xf32, #tpu.memory_space<vmem>>, vector<1x128xf32>
    %17 = arith.truncf %15 : vector<8x64xf32> to vector<8x64xbf16>
    %c0_14 = arith.constant 0 : index
    %c0_15 = arith.constant 0 : index
    %18 = vector.load %arg6[%c0_14, %c0_15] : memref<64x128xbf16, #tpu.memory_space<vmem>>, vector<64x128xbf16>
    %cst_16 = arith.constant dense<0.000000e+00> : vector<8x128xf32>
    %19 = tpu.matmul %17, %18, %cst_16 {dimension_numbers = #tpu.dot_dimension_numbers<[1], [0], [0], [1], [0, 0, 1, 1], [], []>} : vector<8x64xbf16>, vector<64x128xbf16>, vector<8x128xf32> -> vector<8x128xf32>
    %20 = vector.broadcast %16 : vector<1x128xf32> to vector<8x128xf32>
    %21 = arith.addf %20, %19 : vector<8x128xf32>
    %c0_17 = arith.constant 0 : index
    %c0_18 = arith.constant 0 : index
    %22 = vector.load %arg8[%c0_17, %c0_18] : memref<8x128xf32, #tpu.memory_space<vmem>>, vector<8x128xf32>
    tpu.vector_store %arg8[%c0_17, %c0_18], %21 {strides = array<i32>} : memref<8x128xf32, #tpu.memory_space<vmem>>, vector<8x128xf32>,
    return
  }
  func.func @transform_0(%arg0: i32) -> (i32, i32) {
    %c0_i32 = arith.constant 0 : i32
    %c0_i32_0 = arith.constant 0 : i32
    return %arg0, %c0_i32 : i32, i32
  }
  func.func @transform_1(%arg0: i32) -> (i32, i32) {
    %c0_i32 = arith.constant 0 : i32
    %c0_i32_0 = arith.constant 0 : i32
    %c0_i32_1 = arith.constant 0 : i32
    return %c0_i32, %c0_i32_0 : i32, i32
  }
  func.func @transform_2(%arg0: i32) -> (i32, i32) {
    %c0_i32 = arith.constant 0 : i32
    %c0_i32_0 = arith.constant 0 : i32
    %c0_i32_1 = arith.constant 0 : i32
    return %c0_i32, %c0_i32_0 : i32, i32
  }
  func.func @transform_3(%arg0: i32) -> (i32, i32) {
    %c0_i32 = arith.constant 0 : i32
    %c0_i32_0 = arith.constant 0 : i32
    %c0_i32_1 = arith.constant 0 : i32
    return %c0_i32, %c0_i32_0 : i32, i32
  }
  func.func @transform_4(%arg0: i32) -> (i32, i32) {
    %c0_i32 = arith.constant 0 : i32
    %c0_i32_0 = arith.constant 0 : i32
    %c0_i32_1 = arith.constant 0 : i32
    return %c0_i32, %c0_i32_0 : i32, i32
  }
  func.func @transform_5(%arg0: i32) -> (i32, i32) {
    %c0_i32 = arith.constant 0 : i32
    %c0_i32_0 = arith.constant 0 : i32
    %c0_i32_1 = arith.constant 0 : i32
    return %c0_i32, %c0_i32_0 : i32, i32
  }
  func.func @transform_6(%arg0: i32) -> (i32, i32) {
    %c0_i32 = arith.constant 0 : i32
    %c0_i32_0 = arith.constant 0 : i32
    %c0_i32_1 = arith.constant 0 : i32
    return %c0_i32, %c0_i32_0 : i32, i32
  }
  func.func @transform_7(%arg0: i32) -> (i32, i32) {
    %c0_i32 = arith.constant 0 : i32
    %c0_i32_0 = arith.constant 0 : i32
    return %arg0, %c0_i32 : i32, i32
  }
}

</mosaic_0001>

<llo_original>
// kernel: model_forward.1
$region0: #{model_forward.1}
  #allocation0 [shape = 'u32[]', space=smem, size = 0x4, offset = 0x4, fixed_abs, tag = 'smem constant byte address 0x4 - core index']
  #allocation1 [shape = 'u32[72,128]{1,0:T(1,128)}', space=vmem, size = 0x9000, scoped, tag = 'internal scratch']
  %s0 = inlined_call_operand.vmem [shape: bf16[8,32], index: 0, kind: input, shape index: {}]
  %s1 = inlined_call_operand.vmem [shape: bf16[32,64], index: 1, kind: input, shape index: {}]
  %s2 = inlined_call_operand.vmem [shape: f32[1,64], index: 2, kind: input, shape index: {}]
  %s3 = inlined_call_operand.vmem [shape: bf16[64,64], index: 3, kind: input, shape index: {}]
  %s4 = inlined_call_operand.vmem [shape: f32[1,64], index: 4, kind: input, shape index: {}]
  %s5 = inlined_call_operand.vmem [shape: bf16[64,128], index: 5, kind: input, shape index: {}]
  %s6 = inlined_call_operand.vmem [shape: f32[1,128], index: 6, kind: input, shape index: {}]
  %s7 = inlined_call_operand.hbm [shape: f32[8,128], index: 7, kind: output, shape index: {}]
  %s8 = sld [smem:[#allocation0]]
  $region38: #{model_forward.1} parent=0
    _
  %s10 = ssub.s32 1, %s8
  %s11 = scalar_select 0, %s10, %s8
  $region1: #{model_forward.1} parent=0
    #allocation2 [shape = 'u8[4096]{0}', space=vmem, size = 0x1000, scoped, tag = 'output window, operand 0, single buffered']
    #allocation3 [shape = 's32[1]{0}', space=sflag, size = 0x4, scoped, tag = 'scoped memory for model_forward.1']
    %12 = vsyncpa [#allocation3], 0
    // Predicated region
    $region2: #{model_forward.1} parent=1 // pred_check
      _
    $region3: #{model_forward.1} parent=1 // pred_check_branch
      %14 = sbr.rel (0) target = $region5
    $region4: #{model_forward.1} parent=1 // pred_region
      _
    $region5: #{model_forward.1} parent=1 // pred_fallthru
      _
    // Predicated region
    $region6: #{model_forward.1} parent=1 // pred_check
      _
    $region7: #{model_forward.1} parent=1 // pred_check_branch
      %16 = sbr.rel (0) target = $region9
    $region8: #{model_forward.1} parent=1 // pred_region
      _
    $region9: #{model_forward.1} parent=1 // pred_fallthru
      _
    // Predicated region
    $region10: #{model_forward.1} parent=1 // pred_check
      _
    $region11: #{model_forward.1} parent=1 // pred_check_branch
      %18 = sbr.rel (0) target = $region13
    $region12: #{model_forward.1} parent=1 // pred_region
      _
    $region13: #{model_forward.1} parent=1 // pred_fallthru
      _
    // Predicated region
    $region14: #{model_forward.1} parent=1 // pred_check
      _
    $region15: #{model_forward.1} parent=1 // pred_check_branch
      %20 = sbr.rel (0) target = $region17
    $region16: #{model_forward.1} parent=1 // pred_region
      _
    $region17: #{model_forward.1} parent=1 // pred_fallthru
      _
    // Predicated region
    $region18: #{model_forward.1} parent=1 // pred_check
      _
    $region19: #{model_forward.1} parent=1 // pred_check_branch
      %22 = sbr.rel (0) target = $region21
    $region20: #{model_forward.1} parent=1 // pred_region
      _
    $region21: #{model_forward.1} parent=1 // pred_fallthru
      _
    // Predicated region
    $region22: #{model_forward.1} parent=1 // pred_check
      _
    $region23: #{model_forward.1} parent=1 // pred_check_branch
      %24 = sbr.rel (0) target = $region25
    $region24: #{model_forward.1} parent=1 // pred_region
      _
    $region25: #{model_forward.1} parent=1 // pred_fallthru
      _
    // Predicated region
    $region26: #{model_forward.1} parent=1 // pred_check
      _
    $region27: #{model_forward.1} parent=1 // pred_check_branch
      %26 = sbr.rel (0) target = $region29
    $region28: #{model_forward.1} parent=1 // pred_region
      _
    $region29: #{model_forward.1} parent=1 // pred_fallthru
      _
    %v28 = vld [vmem:[%s2] sm:$0x1]
    %v29 = vld [vmem:[%s0] sm:$0xf]
    %v30 = vld [vmem:[%s1] sm:$0xf]
    %v31 = vld [vmem:[%s1 + $0x4] sm:$0xf]
    %v32 = vld [vmem:[%s1 + $0x8] sm:$0xf]
    %v33 = vld [vmem:[%s1 + $0xc] sm:$0xf]
    %v38 = vunpack.c.l.b16 %v30
    %v39 = vunpack.c.l.b16 %v31
    %v40 = vunpack.c.l.b16 %v32
    %v41 = vunpack.c.l.b16 %v33
    %v42 = vpack.c.b16 %v39, %v38
    %v43 = vpack.c.b16 %v41, %v40
    %vm46 = vcmask 261120
    %v48 = vsel %vm46, %v29, 0
    %50 = vmatpush.bf16.msra.mxu0 0
    %51 = vmatpush.bf16.msra.mxu0 0
    %52 = vmatpush.bf16.msra.mxu0 0
    %53 = vmatpush.bf16.msra.mxu0 0
    %54 = vmatpush.bf16.msra.mxu0 0
    %55 = vmatpush.bf16.msra.mxu0 0
    %56 = vmatpush.bf16.msra.mxu0 %v43
    %57 = vmatpush.bf16.msra.mxu0 %v42
    %58 = vmatmul.bf16.gmra.mxu0 %v48
    %v59 = vpop.f32.mrf.mxu0
    %v60 = vadd.f32 0.0, %v59
    %v61 = vpop.f32.mrf.mxu0
    %62 = vdwg.mxu0
    %v64 = vperm.slane %v28, 0
    %v66 = vadd.f32 %v64, %v60
    %v67 = vmax.f32 %v66, 0.0
    %v68 = vld [vmem:[%s4] sm:$0x1]
    %v69 = vpack.c.bf16 %v67, %v67
    %v70 = vld [vmem:[%s3] sm:$0xf]
    %v71 = vld [vmem:[%s3 + $0x4] sm:$0xf]
    %v72 = vld [vmem:[%s3 + $0x8] sm:$0xf]
    %v73 = vld [vmem:[%s3 + $0xc] sm:$0xf]
    %v74 = vld [vmem:[%s3 + $0x10] sm:$0xf]
    %v75 = vld [vmem:[%s3 + $0x14] sm:$0xf]
    %v76 = vld [vmem:[%s3 + $0x18] sm:$0xf]
    %v77 = vld [vmem:[%s3 + $0x1c] sm:$0xf]
    %v86 = vunpack.c.l.b16 %v70
    %v87 = vunpack.c.l.b16 %v71
    %v88 = vunpack.c.l.b16 %v72
    %v89 = vunpack.c.l.b16 %v73
    %v90 = vunpack.c.l.b16 %v74
    %v91 = vunpack.c.l.b16 %v75
    %v92 = vunpack.c.l.b16 %v76
    %v93 = vunpack.c.l.b16 %v77
    %v94 = vpack.c.b16 %v87, %v86
    %v95 = vpack.c.b16 %v89, %v88
    %v96 = vpack.c.b16 %v91, %v90
    %v97 = vpack.c.b16 %v93, %v92
    %vm102 = vcmask 523264
    %v104 = vsel %vm102, %v69, 0
    %106 = vmatpush.bf16.msra.mxu0 0
    %107 = vmatpush.bf16.msra.mxu0 0
    %108 = vmatpush.bf16.msra.mxu0 0
    %109 = vmatpush.bf16.msra.mxu0 0
    %110 = vmatpush.bf16.msra.mxu0 %v97
    %111 = vmatpush.bf16.msra.mxu0 %v96
    %112 = vmatpush.bf16.msra.mxu0 %v95
    %113 = vmatpush.bf16.msra.mxu0 %v94
    %114 = vmatmul.bf16.gmra.mxu0 %v104
    %v115 = vpop.f32.mrf.mxu0
    %v116 = vadd.f32 0.0, %v115
    %v117 = vpop.f32.mrf.mxu0
    %118 = vdwg.mxu0
    %v120 = vperm.slane %v68, 0
    %v122 = vadd.f32 %v120, %v116
    %v123 = vmax.f32 %v122, 0.0
    %v124 = vld [vmem:[%s6] sm:$0x1]
    %v125 = vpack.c.bf16 %v123, %v123
    %v126 = vld [vmem:[%s5] sm:$0xf]
    %v127 = vld [vmem:[%s5 + $0x4] sm:$0xf]
    %v128 = vld [vmem:[%s5 + $0x8] sm:$0xf]
    %v129 = vld [vmem:[%s5 + $0xc] sm:$0xf]
    %v130 = vld [vmem:[%s5 + $0x10] sm:$0xf]
    %v131 = vld [vmem:[%s5 + $0x14] sm:$0xf]
    %v132 = vld [vmem:[%s5 + $0x18] sm:$0xf]
    %v133 = vld [vmem:[%s5 + $0x1c] sm:$0xf]
    %v142 = vunpack.c.l.b16 %v126
    %v143 = vunpack.c.l.b16 %v127
    %v144 = vunpack.c.l.b16 %v128
    %v145 = vunpack.c.l.b16 %v129
    %v146 = vunpack.c.l.b16 %v130
    %v147 = vunpack.c.l.b16 %v131
    %v148 = vunpack.c.l.b16 %v132
    %v149 = vunpack.c.l.b16 %v133
    %v150 = vpack.c.b16 %v143, %v142
    %v151 = vpack.c.b16 %v145, %v144
    %v152 = vpack.c.b16 %v147, %v146
    %v153 = vpack.c.b16 %v149, %v148
    %v159 = vsel %vm102, %v125, 0
    %161 = vmatpush.bf16.msra.mxu0 0
    %162 = vmatpush.bf16.msra.mxu0 0
    %163 = vmatpush.bf16.msra.mxu0 0
    %164 = vmatpush.bf16.msra.mxu0 0
    %165 = vmatpush.bf16.msra.mxu0 %v153
    %166 = vmatpush.bf16.msra.mxu0 %v152
    %167 = vmatpush.bf16.msra.mxu0 %v151
    %168 = vmatpush.bf16.msra.mxu0 %v150
    %169 = vmatmul.bf16.gmra.mxu0 %v159
    %v170 = vpop.f32.mrf.mxu0
    %v171 = vadd.f32 0.0, %v170
    %v172 = vpop.f32.mrf.mxu0
    %173 = vdwg.mxu0
    %v175 = vperm.slane %v124, 0
    %v177 = vadd.f32 %v175, %v171
    %178 = vst [vmem:[#allocation2] sm:$0xff] %v177
    // Predicated region
    $region30: #{model_forward.1} parent=1 // pred_check
      _
    $region31: #{model_forward.1} parent=1 // pred_check_branch
      %180 = sbr.rel (0) target = $region33
    $region32: #{model_forward.1} parent=1 // pred_region
      %182 = vsyncadd [#allocation3], 0
      %s184 = sshll.u32 [#allocation2], 4
      %s185 = int_to_ptr.vmem [resolvable:$true] %s184
      %s186 = sshll.u32 %s7, 4
      %s187 = int_to_ptr.hbm [resolvable:$true] %s186
      %189 = dma.vmem_to_hbm [thread:$0]  %s185, 128, %s187, [#allocation3]
    $region33: #{model_forward.1} parent=1 // pred_fallthru
      _
    // Predicated region
    $region34: #{model_forward.1} parent=1 // pred_check
      _
    $region35: #{model_forward.1} parent=1 // pred_check_branch
      %191 = sbr.rel (0) target = $region37
    $region36: #{model_forward.1} parent=1 // pred_region
      %193 = dma.done [#allocation3], 128
    $region37: #{model_forward.1} parent=1 // pred_fallthru
      _
    %194 = vsyncpa [#allocation3], 1

</llo_original>
